<compile_context>
chip_gen: v7x
topology: tpu7x:2x2x1
jax: 0.10.0
libtpu: 0.0.40
codegen_flags: <defaults>
</compile_context>

<pallas_src>
import functools

import jax
import jax.numpy as jnp
from jax.experimental import pallas as pl
from jax.experimental.pallas import tpu as pltpu


# ----------------------------------------------------------------------------
# Per-generation VMEM budget (queried once, outside jit).
# ----------------------------------------------------------------------------
def _default_vmem_limit():
    try:
        cap = int(pltpu.get_tpu_info().vmem_capacity_bytes)
    except Exception:
        cap = 64 * 1024 * 1024  # conservative fallback: v7x per-TensorCore VMEM
    # use ~75% of physical, leave headroom for compiler-internal scratch;
    # cap at 96 MiB so v5e/v6e (128 MiB) keep slack.
    return max(32 * 1024 * 1024, min(cap * 3 // 4, 96 * 1024 * 1024))


_VMEM_LIMIT = _default_vmem_limit()


def _pick_pixel_tile(P, F_g, F_l, itemsize, vmem_limit):
    """Largest pixel tile (multiple of 128, <=2048) whose double-buffered
    streamed arrays (g, x, out) fit inside the VMEM budget."""
    bytes_per_col = 2 * (F_g + 2 * F_l) * itemsize   # x2 pipeline buffers
    budget = vmem_limit // 2                         # headroom: weights/scratch
    tn = budget // max(bytes_per_col, 1)
    tn = max(128, min(tn, 2048))
    tn = (tn // 128) * 128
    p_up = ((P + 127) // 128) * 128
    return min(tn, p_up)


# ----------------------------------------------------------------------------
# Kernel.  Blocks: g (1, F_g, tn), x (1, F_l, tn), out (1, F_l, tn); pixels on
# the lane axis.  Weights/biases are small resident VMEM operands.
# ----------------------------------------------------------------------------
def attention_gate_kernel(g_ref, x_ref, wg_ref, wx_ref, b_ref, wp_ref, bp_ref,
                          out_ref, *, use_mxu):
    x = x_ref[0]                                   # (F_l, tn)
    xf = x.astype(jnp.float32)

    if use_mxu:
        # fused projections on the MXU, f32 accumulation, pre-summed bias.
        h = (jnp.dot(wg_ref[...], g_ref[0], preferred_element_type=jnp.float32)
             + jnp.dot(wx_ref[...], x, preferred_element_type=jnp.float32))
    else:
        # tiny channel counts: the MXU would run at ~3% utilization while
        # still paying fill/drain; a few unrolled VPU broadcast FMAs keep the
        # kernel purely HBM-bound.
        g = g_ref[0].astype(jnp.float32)           # (F_g, tn)
        wg = wg_ref[...].astype(jnp.float32)       # (F_int, F_g)
        wx = wx_ref[...].astype(jnp.float32)       # (F_int, F_l)
        F_g = g.shape[0]
        F_l = xf.shape[0]
        h = jnp.zeros((wg.shape[0], g.shape[1]), jnp.float32)
        for k in range(F_g):
            h = h + wg[:, k:k + 1] * g[k:k + 1, :]
        for k in range(F_l):
            h = h + wx[:, k:k + 1] * xf[k:k + 1, :]

    h = jnp.maximum(h + b_ref[...], 0.0)           # ReLU, (F_int, tn)

    # psi conv has a single output channel -> VPU multiply + sublane (XLU)
    # reduce instead of a 1-row MXU matmul.
    psi_logit = jnp.sum(h * wp_ref[...], axis=0, keepdims=True) + bp_ref[...]
    psi = jax.nn.sigmoid(psi_logit)                # (1, tn)

    out_ref[0] = (xf * psi).astype(out_ref.dtype)  # broadcast gate over F_l


# ----------------------------------------------------------------------------
# Wrapper: BN folding, free (B, C, H*W) view, grid over (batch, pixel tiles).
# ----------------------------------------------------------------------------
def _fold_bn(w, b, gamma, beta, mean, var, eps=1e-5):
    """Fold eval-mode BatchNorm into a 1x1 conv.  w: (C_out, C_in), b: (C_out,)."""
    scale = gamma / jnp.sqrt(var + eps)
    return w * scale[:, None], (b - mean) * scale + beta


@jax.jit
def attention_gate(g, x, params):
    """g: (B, F_g, H, W), x: (B, F_l, H, W)  ->  (B, F_l, H, W)."""
    B, F_g, H, W = g.shape
    _, F_l, _, _ = x.shape
    F_int = params["wg"].shape[0]
    P = H * W

    # ---- fold eval-mode BatchNorm into the 1x1 convs ----
    wg, bg = _fold_bn(params["wg"], params["bg"], params["g_gamma"],
                      params["g_beta"], params["g_mean"], params["g_var"])
    wx, bx = _fold_bn(params["wx"], params["bx"], params["x_gamma"],
                      params["x_beta"], params["x_mean"], params["x_var"])
    wp, bp = _fold_bn(params["wp"], params["bp"], params["p_gamma"],
                      params["p_beta"], params["p_mean"], params["p_var"])

    wg_m = wg.astype(g.dtype)                              # (F_int, F_g)  W @ X
    wx_m = wx.astype(x.dtype)                              # (F_int, F_l)
    b_comb = (bg + bx).reshape(F_int, 1).astype(jnp.float32)   # pre-summed bias
    wp_col = wp.reshape(F_int, 1).astype(jnp.float32)
    bp_s = bp.reshape(1, 1).astype(jnp.float32)

    # ---- free reshape: NCHW -> (B, C, H*W); pixels go on the lane axis ----
    g3 = g.reshape(B, F_g, P)
    x3 = x.reshape(B, F_l, P)

    tn = _pick_pixel_tile(P, F_g, F_l, jnp.dtype(x.dtype).itemsize, _VMEM_LIMIT)
    P_pad = pl.cdiv(P, tn) * tn
    if P_pad != P:
        g3 = jnp.pad(g3, ((0, 0), (0, 0), (0, P_pad - P)))
        x3 = jnp.pad(x3, ((0, 0), (0, 0), (0, P_pad - P)))

    use_mxu = (F_g + F_l) > 16
    kernel = functools.partial(attention_gate_kernel, use_mxu=use_mxu)

    grid = (B, P_pad // tn)
    pix_spec = lambda c: pl.BlockSpec((1, c, tn), lambda b, j: (b, 0, j))
    full_spec = lambda r, c: pl.BlockSpec((r, c), lambda b, j: (0, 0))

    out3 = pl.pallas_call(
        kernel,
        out_shape=jax.ShapeDtypeStruct((B, F_l, P_pad), x.dtype),
        grid_spec=pltpu.PrefetchScalarGridSpec(
            num_scalar_prefetch=0,
            grid=grid,
            in_specs=[
                pix_spec(F_g),             # g tile      (1, F_g, tn)
                pix_spec(F_l),             # x tile      (1, F_l, tn)
                full_spec(F_int, F_g),     # Wg (BN-folded)
                full_spec(F_int, F_l),     # Wx (BN-folded)
                full_spec(F_int, 1),       # bg + bx
                full_spec(F_int, 1),       # w_psi (column)
                full_spec(1, 1),           # b_psi
            ],
            out_specs=pix_spec(F_l),       # lane-dense output block
        ),
        compiler_params=pltpu.CompilerParams(
            dimension_semantics=("parallel", "parallel"),
            vmem_limit_bytes=_VMEM_LIMIT),
    )(g3, x3, wg_m, wx_m, b_comb, wp_col, bp_s)

    return out3[:, :, :P].reshape(B, F_l, H, W)


# ----------------------------------------------------------------------------
# Pure-JAX reference (eval-mode BN, NCHW) and parameter construction.
# ----------------------------------------------------------------------------
def _reference(g, x, params, eps=1e-5):
    def conv_bn(inp, w, b, gamma, beta, mean, var):
        y = jnp.einsum("bchw,oc->bohw", inp, w) + b[None, :, None, None]
        y = (y - mean[None, :, None, None]) / jnp.sqrt(var[None, :, None, None] + eps)
        return y * gamma[None, :, None, None] + beta[None, :, None, None]

    g1 = conv_bn(g, params["wg"], params["bg"], params["g_gamma"],
                 params["g_beta"], params["g_mean"], params["g_var"])
    x1 = conv_bn(x, params["wx"], params["bx"], params["x_gamma"],
                 params["x_beta"], params["x_mean"], params["x_var"])
    h = jnp.maximum(g1 + x1, 0.0)
    psi = conv_bn(h, params["wp"], params["bp"], params["p_gamma"],
                  params["p_beta"], params["p_mean"], params["p_var"])
    psi = jax.nn.sigmoid(psi)
    return x * psi


def make_params(key, F_g, F_l, F_int):
    ks = jax.random.split(key, 12)

    def bn(k, c):
        k1, k2, k3, k4 = jax.random.split(k, 4)
        return dict(gamma=1.0 + 0.1 * jax.random.normal(k1, (c,)),
                    beta=0.1 * jax.random.normal(k2, (c,)),
                    mean=0.1 * jax.random.normal(k3, (c,)),
                    var=0.5 + jnp.abs(jax.random.normal(k4, (c,))))

    bn_g, bn_x, bn_p = bn(ks[0], F_int), bn(ks[1], F_int), bn(ks[2], 1)
    p = {
        "wg": 0.3 * jax.random.normal(ks[3], (F_int, F_g)),
        "bg": 0.1 * jax.random.normal(ks[4], (F_int,)),
        "wx": 0.3 * jax.random.normal(ks[5], (F_int, F_l)),
        "bx": 0.1 * jax.random.normal(ks[6], (F_int,)),
        "wp": 0.3 * jax.random.normal(ks[7], (1, F_int)),
        "bp": 0.1 * jax.random.normal(ks[8], (1,)),
        "g_gamma": bn_g["gamma"], "g_beta": bn_g["beta"],
        "g_mean": bn_g["mean"], "g_var": bn_g["var"],
        "x_gamma": bn_x["gamma"], "x_beta": bn_x["beta"],
        "x_mean": bn_x["mean"], "x_var": bn_x["var"],
        "p_gamma": bn_p["gamma"], "p_beta": bn_p["beta"],
        "p_mean": bn_p["mean"], "p_var": bn_p["var"],
    }
    return {k: v.astype(jnp.float32) for k, v in p.items()}


if __name__ == "__main__":
    B, F_g, F_l, F_int, H, W = 2, 4, 4, 8, 16, 16

    key = jax.random.PRNGKey(0)
    kg, kx, kp = jax.random.split(key, 3)
    g = jax.random.normal(kg, (B, F_g, H, W), dtype=jnp.float32)
    x = jax.random.normal(kx, (B, F_l, H, W), dtype=jnp.float32)
    params = make_params(kp, F_g, F_l, F_int)

    out = attention_gate(g, x, params)
    jax.block_until_ready(out)

    ref = _reference(g, x, params)
    assert out.shape == x.shape
    assert jnp.allclose(out, ref, atol=1e-4, rtol=1e-4), "mismatch vs reference"

    print("KERNEL_OK")
</pallas_src>

<mosaic_0001>
module attributes {stable_mosaic.version = 11 : i64} {
  func.func @attention_gate_kernel(%arg0: i32, %arg1: i32, %arg2: memref<1x4x256xf32, #tpu.memory_space<vmem>>, %arg3: memref<1x4x256xf32, #tpu.memory_space<vmem>>, %arg4: memref<8x4xf32, #tpu.memory_space<vmem>>, %arg5: memref<8x4xf32, #tpu.memory_space<vmem>>, %arg6: memref<8x1xf32, #tpu.memory_space<vmem>>, %arg7: memref<8x1xf32, #tpu.memory_space<vmem>>, %arg8: memref<1x1xf32, #tpu.memory_space<vmem>>, %arg9: memref<1x4x256xf32, #tpu.memory_space<vmem>>) attributes {dimension_semantics = [#tpu.dimension_semantics<parallel>, #tpu.dimension_semantics<parallel>], iteration_bounds = array<i64: 2, 1>, scalar_prefetch = 0 : i64, scratch_operands = 0 : i64, tpu.core_type = #tpu.core_type<tc>, window_params = [{transform_indices = @transform_0, window_bounds = array<i64: 1, 4, 256>}, {transform_indices = @transform_1, window_bounds = array<i64: 1, 4, 256>}, {pipeline_mode = #tpu.pipeline_mode<synchronous>, transform_indices = @transform_2, window_bounds = array<i64: 8, 4>}, {pipeline_mode = #tpu.pipeline_mode<synchronous>, transform_indices = @transform_3, window_bounds = array<i64: 8, 4>}, {pipeline_mode = #tpu.pipeline_mode<synchronous>, transform_indices = @transform_4, window_bounds = array<i64: 8, 1>}, {pipeline_mode = #tpu.pipeline_mode<synchronous>, transform_indices = @transform_5, window_bounds = array<i64: 8, 1>}, {pipeline_mode = #tpu.pipeline_mode<synchronous>, transform_indices = @transform_6, window_bounds = array<i64: 1, 1>}, {transform_indices = @transform_7, window_bounds = array<i64: 1, 4, 256>}]} {
    %c0 = arith.constant 0 : index
    %c0_0 = arith.constant 0 : index
    %c0_1 = arith.constant 0 : index
    %0 = vector.load %arg3[%c0, %c0_0, %c0_1] : memref<1x4x256xf32, #tpu.memory_space<vmem>>, vector<1x4x256xf32>
    %1 = vector.shape_cast %0 : vector<1x4x256xf32> to vector<4x256xf32>
    %c0_2 = arith.constant 0 : index
    %c0_3 = arith.constant 0 : index
    %c0_4 = arith.constant 0 : index
    %2 = vector.load %arg2[%c0_2, %c0_3, %c0_4] : memref<1x4x256xf32, #tpu.memory_space<vmem>>, vector<1x4x256xf32>
    %3 = vector.shape_cast %2 : vector<1x4x256xf32> to vector<4x256xf32>
    %c0_5 = arith.constant 0 : index
    %c0_6 = arith.constant 0 : index
    %4 = vector.load %arg4[%c0_5, %c0_6] : memref<8x4xf32, #tpu.memory_space<vmem>>, vector<8x4xf32>
    %c0_7 = arith.constant 0 : index
    %c0_8 = arith.constant 0 : index
    %5 = vector.load %arg5[%c0_7, %c0_8] : memref<8x4xf32, #tpu.memory_space<vmem>>, vector<8x4xf32>
    %cst = arith.constant 0.000000e+00 : f32
    %6 = vector.broadcast %cst : f32 to vector<8x256xf32>
    %7 = vector.extract_strided_slice %4 {offsets = [0, 0], sizes = [8, 1], strides = [1, 1]} : vector<8x4xf32> to vector<8x1xf32>
    %8 = vector.extract_strided_slice %3 {offsets = [0, 0], sizes = [1, 256], strides = [1, 1]} : vector<4x256xf32> to vector<1x256xf32>
    %9 = vector.broadcast %7 : vector<8x1xf32> to vector<8x256xf32>
    %10 = vector.broadcast %8 : vector<1x256xf32> to vector<8x256xf32>
    %11 = arith.mulf %9, %10 : vector<8x256xf32>
    %12 = arith.addf %6, %11 : vector<8x256xf32>
    %13 = vector.extract_strided_slice %4 {offsets = [0, 1], sizes = [8, 1], strides = [1, 1]} : vector<8x4xf32> to vector<8x1xf32>
    %14 = vector.extract_strided_slice %3 {offsets = [1, 0], sizes = [1, 256], strides = [1, 1]} : vector<4x256xf32> to vector<1x256xf32>
    %15 = vector.broadcast %13 : vector<8x1xf32> to vector<8x256xf32>
    %16 = vector.broadcast %14 : vector<1x256xf32> to vector<8x256xf32>
    %17 = arith.mulf %15, %16 : vector<8x256xf32>
    %18 = arith.addf %12, %17 : vector<8x256xf32>
    %19 = vector.extract_strided_slice %4 {offsets = [0, 2], sizes = [8, 1], strides = [1, 1]} : vector<8x4xf32> to vector<8x1xf32>
    %20 = vector.extract_strided_slice %3 {offsets = [2, 0], sizes = [1, 256], strides = [1, 1]} : vector<4x256xf32> to vector<1x256xf32>
    %21 = vector.broadcast %19 : vector<8x1xf32> to vector<8x256xf32>
    %22 = vector.broadcast %20 : vector<1x256xf32> to vector<8x256xf32>
    %23 = arith.mulf %21, %22 : vector<8x256xf32>
    %24 = arith.addf %18, %23 : vector<8x256xf32>
    %25 = vector.extract_strided_slice %4 {offsets = [0, 3], sizes = [8, 1], strides = [1, 1]} : vector<8x4xf32> to vector<8x1xf32>
    %26 = vector.extract_strided_slice %3 {offsets = [3, 0], sizes = [1, 256], strides = [1, 1]} : vector<4x256xf32> to vector<1x256xf32>
    %27 = vector.broadcast %25 : vector<8x1xf32> to vector<8x256xf32>
    %28 = vector.broadcast %26 : vector<1x256xf32> to vector<8x256xf32>
    %29 = arith.mulf %27, %28 : vector<8x256xf32>
    %30 = arith.addf %24, %29 : vector<8x256xf32>
    %31 = vector.extract_strided_slice %5 {offsets = [0, 0], sizes = [8, 1], strides = [1, 1]} : vector<8x4xf32> to vector<8x1xf32>
    %32 = vector.extract_strided_slice %1 {offsets = [0, 0], sizes = [1, 256], strides = [1, 1]} : vector<4x256xf32> to vector<1x256xf32>
    %33 = vector.broadcast %31 : vector<8x1xf32> to vector<8x256xf32>
    %34 = vector.broadcast %32 : vector<1x256xf32> to vector<8x256xf32>
    %35 = arith.mulf %33, %34 : vector<8x256xf32>
    %36 = arith.addf %30, %35 : vector<8x256xf32>
    %37 = vector.extract_strided_slice %5 {offsets = [0, 1], sizes = [8, 1], strides = [1, 1]} : vector<8x4xf32> to vector<8x1xf32>
    %38 = vector.extract_strided_slice %1 {offsets = [1, 0], sizes = [1, 256], strides = [1, 1]} : vector<4x256xf32> to vector<1x256xf32>
    %39 = vector.broadcast %37 : vector<8x1xf32> to vector<8x256xf32>
    %40 = vector.broadcast %38 : vector<1x256xf32> to vector<8x256xf32>
    %41 = arith.mulf %39, %40 : vector<8x256xf32>
    %42 = arith.addf %36, %41 : vector<8x256xf32>
    %43 = vector.extract_strided_slice %5 {offsets = [0, 2], sizes = [8, 1], strides = [1, 1]} : vector<8x4xf32> to vector<8x1xf32>
    %44 = vector.extract_strided_slice %1 {offsets = [2, 0], sizes = [1, 256], strides = [1, 1]} : vector<4x256xf32> to vector<1x256xf32>
    %45 = vector.broadcast %43 : vector<8x1xf32> to vector<8x256xf32>
    %46 = vector.broadcast %44 : vector<1x256xf32> to vector<8x256xf32>
    %47 = arith.mulf %45, %46 : vector<8x256xf32>
    %48 = arith.addf %42, %47 : vector<8x256xf32>
    %49 = vector.extract_strided_slice %5 {offsets = [0, 3], sizes = [8, 1], strides = [1, 1]} : vector<8x4xf32> to vector<8x1xf32>
    %50 = vector.extract_strided_slice %1 {offsets = [3, 0], sizes = [1, 256], strides = [1, 1]} : vector<4x256xf32> to vector<1x256xf32>
    %51 = vector.broadcast %49 : vector<8x1xf32> to vector<8x256xf32>
    %52 = vector.broadcast %50 : vector<1x256xf32> to vector<8x256xf32>
    %53 = arith.mulf %51, %52 : vector<8x256xf32>
    %54 = arith.addf %48, %53 : vector<8x256xf32>
    %c0_9 = arith.constant 0 : index
    %c0_10 = arith.constant 0 : index
    %55 = vector.load %arg6[%c0_9, %c0_10] : memref<8x1xf32, #tpu.memory_space<vmem>>, vector<8x1xf32>
    %56 = vector.broadcast %55 : vector<8x1xf32> to vector<8x256xf32>
    %57 = arith.addf %54, %56 : vector<8x256xf32>
    %cst_11 = arith.constant 0.000000e+00 : f32
    %58 = vector.broadcast %cst_11 : f32 to vector<8x256xf32>
    %59 = arith.maximumf %57, %58 : vector<8x256xf32>
    %c0_12 = arith.constant 0 : index
    %c0_13 = arith.constant 0 : index
    %60 = vector.load %arg7[%c0_12, %c0_13] : memref<8x1xf32, #tpu.memory_space<vmem>>, vector<8x1xf32>
    %61 = vector.broadcast %60 : vector<8x1xf32> to vector<8x256xf32>
    %62 = arith.mulf %59, %61 : vector<8x256xf32>
    %cst_14 = arith.constant dense<0.000000e+00> : vector<256xf32>
    %63 = vector.multi_reduction <add>, %62, %cst_14 [0] : vector<8x256xf32> to vector<256xf32>
    %64 = vector.shape_cast %63 : vector<256xf32> to vector<1x256xf32>
    %c0_15 = arith.constant 0 : index
    %c0_16 = arith.constant 0 : index
    %65 = vector.load %arg8[%c0_15, %c0_16] : memref<1x1xf32, #tpu.memory_space<vmem>>, vector<1x1xf32>
    %66 = vector.broadcast %65 : vector<1x1xf32> to vector<1x256xf32>
    %67 = arith.addf %64, %66 : vector<1x256xf32>
    %68 = arith.negf %67 : vector<1x256xf32>
    %69 = math.exp %68 : vector<1x256xf32>
    %cst_17 = arith.constant 1.000000e+00 : f32
    %70 = vector.broadcast %cst_17 : f32 to vector<1x256xf32>
    %71 = arith.addf %70, %69 : vector<1x256xf32>
    %72 = arith.divf %70, %71 : vector<1x256xf32>
    %73 = vector.broadcast %72 : vector<1x256xf32> to vector<4x256xf32>
    %74 = arith.mulf %1, %73 : vector<4x256xf32>
    %c0_18 = arith.constant 0 : index
    %c0_19 = arith.constant 0 : index
    %c0_20 = arith.constant 0 : index
    %75 = vector.load %arg9[%c0_18, %c0_19, %c0_20] : memref<1x4x256xf32, #tpu.memory_space<vmem>>, vector<1x4x256xf32>
    %76 = vector.shape_cast %75 : vector<1x4x256xf32> to vector<4x256xf32>
    %77 = vector.shape_cast %74 : vector<4x256xf32> to vector<1x4x256xf32>
    tpu.vector_store %arg9[%c0_18, %c0_19, %c0_20], %77 {strides = array<i32>} : memref<1x4x256xf32, #tpu.memory_space<vmem>>, vector<1x4x256xf32>,
    return
  }
  func.func @transform_0(%arg0: i32, %arg1: i32) -> (i32, i32, i32) {
    %c0_i32 = arith.constant 0 : i32
    %c0_i32_0 = arith.constant 0 : i32
    return %arg0, %c0_i32, %arg1 : i32, i32, i32
  }
  func.func @transform_1(%arg0: i32, %arg1: i32) -> (i32, i32, i32) {
    %c0_i32 = arith.constant 0 : i32
    %c0_i32_0 = arith.constant 0 : i32
    return %arg0, %c0_i32, %arg1 : i32, i32, i32
  }
  func.func @transform_2(%arg0: i32, %arg1: i32) -> (i32, i32) {
    %c0_i32 = arith.constant 0 : i32
    %c0_i32_0 = arith.constant 0 : i32
    %c0_i32_1 = arith.constant 0 : i32
    return %c0_i32, %c0_i32_0 : i32, i32
  }
  func.func @transform_3(%arg0: i32, %arg1: i32) -> (i32, i32) {
    %c0_i32 = arith.constant 0 : i32
    %c0_i32_0 = arith.constant 0 : i32
    %c0_i32_1 = arith.constant 0 : i32
    return %c0_i32, %c0_i32_0 : i32, i32
  }
  func.func @transform_4(%arg0: i32, %arg1: i32) -> (i32, i32) {
    %c0_i32 = arith.constant 0 : i32
    %c0_i32_0 = arith.constant 0 : i32
    %c0_i32_1 = arith.constant 0 : i32
    return %c0_i32, %c0_i32_0 : i32, i32
  }
  func.func @transform_5(%arg0: i32, %arg1: i32) -> (i32, i32) {
    %c0_i32 = arith.constant 0 : i32
    %c0_i32_0 = arith.constant 0 : i32
    %c0_i32_1 = arith.constant 0 : i32
    return %c0_i32, %c0_i32_0 : i32, i32
  }
  func.func @transform_6(%arg0: i32, %arg1: i32) -> (i32, i32) {
    %c0_i32 = arith.constant 0 : i32
    %c0_i32_0 = arith.constant 0 : i32
    %c0_i32_1 = arith.constant 0 : i32
    return %c0_i32, %c0_i32_0 : i32, i32
  }
  func.func @transform_7(%arg0: i32, %arg1: i32) -> (i32, i32, i32) {
    %c0_i32 = arith.constant 0 : i32
    %c0_i32_0 = arith.constant 0 : i32
    return %arg0, %c0_i32, %arg1 : i32, i32, i32
  }
}

</mosaic_0001>

<llo_original>
// kernel: attention_gate.1
$region0: #{attention_gate.1}
  #allocation0 [shape = 'u32[]', space=smem, size = 0x4, offset = 0x4, fixed_abs, tag = 'smem constant byte address 0x4 - core index']
  #allocation1 [shape = 'u32[144,128]{1,0:T(1,128)}', space=vmem, size = 0x12000, scoped, tag = 'internal scratch']
  #allocation2 [shape = 'f32[1,1]{1,0:T(1,128)S(1)}', space=vmem, size = 0x200, scoped, tag = 'scoped memory for attention_gate.1']
  %s0 = inlined_call_operand.vmem [shape: f32[2,4,256], index: 0, kind: input, shape index: {}]
  %s1 = inlined_call_operand.vmem [shape: f32[2,4,256], index: 1, kind: input, shape index: {}]
  %s2 = inlined_call_operand.vmem [shape: f32[8,4], index: 2, kind: input, shape index: {}]
  %s3 = inlined_call_operand.vmem [shape: f32[8,4], index: 3, kind: input, shape index: {}]
  %s4 = inlined_call_operand.vmem [shape: f32[8,1], index: 4, kind: input, shape index: {}]
  %s5 = inlined_call_operand.vmem [shape: f32[8,1], index: 5, kind: input, shape index: {}]
  %s6 = inlined_call_operand.<no memory space> [shape: f32[1,1], index: 6, kind: input, shape index: {}]
  %s7 = inlined_call_operand.vmem [shape: f32[2,4,256], index: 7, kind: output, shape index: {}]
  %s8 = sld [smem:[#allocation0]]
  $region61: #{attention_gate.1} parent=0
    _
  %s10 = ssub.s32 1, %s8
  %s11 = scalar_select 0, %s10, %s8
  %v12 = vstv %s6
  %13 = vst [vmem:[#allocation2] sm:$0x1] %v12
  loop: start=0, step=1, limit=4
  $region2: #{attention_gate.1} parent=0 // loop_pre_header
    _
  $region3: #{attention_gate.1} parent=0 // loop_header
    %s15 = sphi 0, %s19
    %p16 = scmp.ge.s32.totalorder %s15, 4
    %s22 = sphi 0, %s34
    %s23 = sphi 0, %s30
    %s24 = sphi 0, %s22
    %s25 = sphi 0, %s23
    %s26 = sphi 0, %s24
    %s27 = sphi 0, %s25
    %s39 = sphi 0, %s41
    %s42 = sphi 0, %s39
    %s43 = sphi 0, %s42
    %s59 = sphi 0, %s43
    %s67 = sphi 0, %s69
    %s70 = sphi 0, %s67
    %s71 = sphi 0, %s70
    %s87 = sphi 0, %s71
    %s91 = sphi 0, %s91
    %s93 = sphi 0, %s91
    %s94 = sphi 0, %s93
    %s108 = sphi 0, %s94
    %s112 = sphi 0, %s112
    %s114 = sphi 0, %s112
    %s115 = sphi 0, %s114
    %s129 = sphi 0, %s115
    %s133 = sphi 0, %s133
    %s135 = sphi 0, %s133
    %s136 = sphi 0, %s135
    %s150 = sphi 0, %s136
    %s154 = sphi 0, %s154
    %s156 = sphi 0, %s154
    %s157 = sphi 0, %s156
    %s171 = sphi 0, %s157
    %s175 = sphi 0, %s175
    %s177 = sphi 0, %s175
    %s178 = sphi 0, %s177
    %s192 = sphi 0, %s178
    %s200 = sphi 0, %s202
    %s203 = sphi 0, %s200
    %s204 = sphi 0, %s203
    %s220 = sphi 0, %s204
  $region4: #{attention_gate.1} parent=0 // loop_header_branch
    %18 = sbr.rel (%p16) target = $region8
  $region5: #{attention_gate.1} parent=0 // loop_body
    %s20 = ssub.s32 %s15, 1
    %s21 = ssub.s32 %s15, 2
    %s28 = sadd.s32 1, %s23
    %p29 = scmp.ge.s32.totalorder %s28, 1
    %s30 = scalar_select %p29, 0, %s28
    %s31 = sadd.s32 1, %s22
    %s32 = scalar_select %p29, %s31, %s22
    %p33 = scmp.ge.s32.totalorder %s32, 2
    %s34 = scalar_select %p33, 0, %s32
    %s35 = ssub.s32 %s22, %s34
    %s36 = ssub.s32 %s23, %s30
    %s37 = sor.u32 %s35, %s36
    %p38 = scmp.eq.s32.totalorder %s37, 0
    %s40 = sadd.s32 %s39, 1
    %s41 = scalar_select %p38, %s39, %s40
    %p44 = pneg %p38
    %p45 = scmp.eq.s32.totalorder %s15, 1
    %p46 = por %p44, %p45
    %p47 = scmp.ne.s32.totalorder %s39, %s42
    %p48 = scmp.eq.s32.totalorder %s15, 0
    %p49 = por %p47, %p48
    %p50 = scmp.ne.s32.totalorder %s39, %s42
    %p51 = scmp.eq.s32.totalorder %s20, 1
    %p52 = por %p50, %p51
    %p53 = scmp.ne.s32.totalorder %s42, %s43
    %p54 = scmp.eq.s32.totalorder %s20, 0
    %p55 = por %p53, %p54
    %p56 = scmp.ne.s32.totalorder %s42, %s43
    %p57 = scmp.eq.s32.totalorder %s21, 1
    %p58 = por %p56, %p57
    %p60 = scmp.ne.s32.totalorder %s43, %s59
    %p61 = scmp.eq.s32.totalorder %s21, 0
    %p62 = por %p60, %p61
    %s63 = ssub.s32 %s22, %s34
    %s64 = ssub.s32 %s23, %s30
    %s65 = sor.u32 %s63, %s64
    %p66 = scmp.eq.s32.totalorder %s65, 0
    %s68 = sadd.s32 %s67, 1
    %s69 = scalar_select %p66, %s67, %s68
    %p72 = pneg %p66
    %p73 = scmp.eq.s32.totalorder %s15, 1
    %p74 = por %p72, %p73
    %p75 = scmp.ne.s32.totalorder %s67, %s70
    %p76 = scmp.eq.s32.totalorder %s15, 0
    %p77 = por %p75, %p76
    %p78 = scmp.ne.s32.totalorder %s67, %s70
    %p79 = scmp.eq.s32.totalorder %s20, 1
    %p80 = por %p78, %p79
    %p81 = scmp.ne.s32.totalorder %s70, %s71
    %p82 = scmp.eq.s32.totalorder %s20, 0
    %p83 = por %p81, %p82
    %p84 = scmp.ne.s32.totalorder %s70, %s71
    %p85 = scmp.eq.s32.totalorder %s21, 1
    %p86 = por %p84, %p85
    %p88 = scmp.ne.s32.totalorder %s71, %s87
    %p89 = scmp.eq.s32.totalorder %s21, 0
    %p90 = por %p88, %p89
    %s92 = sadd.s32 %s91, 1
    %p95 = scmp.eq.s32.totalorder %s15, 1
    %p96 = scmp.ne.s32.totalorder %s91, %s93
    %p97 = scmp.eq.s32.totalorder %s15, 0
    %p98 = por %p96, %p97
    %p99 = scmp.ne.s32.totalorder %s91, %s93
    %p100 = scmp.eq.s32.totalorder %s20, 1
    %p101 = por %p99, %p100
    %p102 = scmp.ne.s32.totalorder %s93, %s94
    %p103 = scmp.eq.s32.totalorder %s20, 0
    %p104 = por %p102, %p103
    %p105 = scmp.ne.s32.totalorder %s93, %s94
    %p106 = scmp.eq.s32.totalorder %s21, 1
    %p107 = por %p105, %p106
    %p109 = scmp.ne.s32.totalorder %s94, %s108
    %p110 = scmp.eq.s32.totalorder %s21, 0
    %p111 = por %p109, %p110
    %s113 = sadd.s32 %s112, 1
    %p116 = scmp.eq.s32.totalorder %s15, 1
    %p117 = scmp.ne.s32.totalorder %s112, %s114
    %p118 = scmp.eq.s32.totalorder %s15, 0
    %p119 = por %p117, %p118
    %p120 = scmp.ne.s32.totalorder %s112, %s114
    %p121 = scmp.eq.s32.totalorder %s20, 1
    %p122 = por %p120, %p121
    %p123 = scmp.ne.s32.totalorder %s114, %s115
    %p124 = scmp.eq.s32.totalorder %s20, 0
    %p125 = por %p123, %p124
    %p126 = scmp.ne.s32.totalorder %s114, %s115
    %p127 = scmp.eq.s32.totalorder %s21, 1
    %p128 = por %p126, %p127
    %p130 = scmp.ne.s32.totalorder %s115, %s129
    %p131 = scmp.eq.s32.totalorder %s21, 0
    %p132 = por %p130, %p131
    %s134 = sadd.s32 %s133, 1
    %p137 = scmp.eq.s32.totalorder %s15, 1
    %p138 = scmp.ne.s32.totalorder %s133, %s135
    %p139 = scmp.eq.s32.totalorder %s15, 0
    %p140 = por %p138, %p139
    %p141 = scmp.ne.s32.totalorder %s133, %s135
    %p142 = scmp.eq.s32.totalorder %s20, 1
    %p143 = por %p141, %p142
    %p144 = scmp.ne.s32.totalorder %s135, %s136
    %p145 = scmp.eq.s32.totalorder %s20, 0
    %p146 = por %p144, %p145
    %p147 = scmp.ne.s32.totalorder %s135, %s136
    %p148 = scmp.eq.s32.totalorder %s21, 1
    %p149 = por %p147, %p148
    %p151 = scmp.ne.s32.totalorder %s136, %s150
    %p152 = scmp.eq.s32.totalorder %s21, 0
    %p153 = por %p151, %p152
    %s155 = sadd.s32 %s154, 1
    %p158 = scmp.eq.s32.totalorder %s15, 1
    %p159 = scmp.ne.s32.totalorder %s154, %s156
    %p160 = scmp.eq.s32.totalorder %s15, 0
    %p161 = por %p159, %p160
    %p162 = scmp.ne.s32.totalorder %s154, %s156
    %p163 = scmp.eq.s32.totalorder %s20, 1
    %p164 = por %p162, %p163
    %p165 = scmp.ne.s32.totalorder %s156, %s157
    %p166 = scmp.eq.s32.totalorder %s20, 0
    %p167 = por %p165, %p166
    %p168 = scmp.ne.s32.totalorder %s156, %s157
    %p169 = scmp.eq.s32.totalorder %s21, 1
    %p170 = por %p168, %p169
    %p172 = scmp.ne.s32.totalorder %s157, %s171
    %p173 = scmp.eq.s32.totalorder %s21, 0
    %p174 = por %p172, %p173
    %s176 = sadd.s32 %s175, 1
    %p179 = scmp.eq.s32.totalorder %s15, 1
    %p180 = scmp.ne.s32.totalorder %s175, %s177
    %p181 = scmp.eq.s32.totalorder %s15, 0
    %p182 = por %p180, %p181
    %p183 = scmp.ne.s32.totalorder %s175, %s177
    %p184 = scmp.eq.s32.totalorder %s20, 1
    %p185 = por %p183, %p184
    %p186 = scmp.ne.s32.totalorder %s177, %s178
    %p187 = scmp.eq.s32.totalorder %s20, 0
    %p188 = por %p186, %p187
    %p189 = scmp.ne.s32.totalorder %s177, %s178
    %p190 = scmp.eq.s32.totalorder %s21, 1
    %p191 = por %p189, %p190
    %p193 = scmp.ne.s32.totalorder %s178, %s192
    %p194 = scmp.eq.s32.totalorder %s21, 0
    %p195 = por %p193, %p194
    %s196 = ssub.s32 %s22, %s34
    %s197 = ssub.s32 %s23, %s30
    %s198 = sor.u32 %s196, %s197
    %p199 = scmp.eq.s32.totalorder %s198, 0
    %s201 = sadd.s32 %s200, 1
    %s202 = scalar_select %p199, %s200, %s201
    %p205 = pneg %p199
    %p206 = scmp.eq.s32.totalorder %s15, 1
    %p207 = por %p205, %p206
    %p208 = scmp.ne.s32.totalorder %s200, %s203
    %p209 = scmp.eq.s32.totalorder %s15, 0
    %p210 = por %p208, %p209
    %p211 = scmp.ne.s32.totalorder %s200, %s203
    %p212 = scmp.eq.s32.totalorder %s20, 1
    %p213 = por %p211, %p212
    %p214 = scmp.ne.s32.totalorder %s203, %s204
    %p215 = scmp.eq.s32.totalorder %s20, 0
    %p216 = por %p214, %p215
    %p217 = scmp.ne.s32.totalorder %s203, %s204
    %p218 = scmp.eq.s32.totalorder %s21, 1
    %p219 = por %p217, %p218
    %p221 = scmp.ne.s32.totalorder %s204, %s220
    %p222 = scmp.eq.s32.totalorder %s21, 0
    %p223 = por %p221, %p222
    %p224 = scmp.le.s32.totalorder 1, %s15
    %p225 = scmp.lt.s32.totalorder %s15, 3
    %p226 = pnand %p224, %p225
    %p227 = pneg %p226
    // Predicated region
    $region9: #{attention_gate.1} parent=5 // pred_check
      _
    $region10: #{attention_gate.1} parent=5 // pred_check_branch
      %229 = sbr.rel (%p226) target = $region12
    $region11: #{attention_gate.1} parent=5 // pred_region
      %s230 = ssub.s32 %s15, 1
      // Predicated region
      $region13: #{attention_gate.1} parent=11 // pred_check
        %p231 = pneg %p104
      $region14: #{attention_gate.1} parent=11 // pred_check_branch
        %233 = sbr.rel (%p231) target = $region16
      $region15: #{attention_gate.1} parent=11 // pred_region
        _
      $region16: #{attention_gate.1} parent=11 // pred_fallthru
        _
      // Predicated region
      $region17: #{attention_gate.1} parent=11 // pred_check
        %p234 = pneg %p125
      $region18: #{attention_gate.1} parent=11 // pred_check_branch
        %236 = sbr.rel (%p234) target = $region20
      $region19: #{attention_gate.1} parent=11 // pred_region
        _
      $region20: #{attention_gate.1} parent=11 // pred_fallthru
        _
      // Predicated region
      $region21: #{attention_gate.1} parent=11 // pred_check
        %p237 = pneg %p146
      $region22: #{attention_gate.1} parent=11 // pred_check_branch
        %239 = sbr.rel (%p237) target = $region24
      $region23: #{attention_gate.1} parent=11 // pred_region
        _
      $region24: #{attention_gate.1} parent=11 // pred_fallthru
        _
      // Predicated region
      $region25: #{attention_gate.1} parent=11 // pred_check
        %p240 = pneg %p167
      $region26: #{attention_gate.1} parent=11 // pred_check_branch
        %242 = sbr.rel (%p240) target = $region28
      $region27: #{attention_gate.1} parent=11 // pred_region
        _
      $region28: #{attention_gate.1} parent=11 // pred_fallthru
        _
      // Predicated region
      $region29: #{attention_gate.1} parent=11 // pred_check
        %p243 = pneg %p188
      $region30: #{attention_gate.1} parent=11 // pred_check_branch
        %245 = sbr.rel (%p243) target = $region32
      $region31: #{attention_gate.1} parent=11 // pred_region
        _
      $region32: #{attention_gate.1} parent=11 // pred_fallthru
        _
    $region12: #{attention_gate.1} parent=5 // pred_fallthru
      _
    %p246 = scmp.lt.s32.totalorder %s15, 2
    // Predicated region
    $region33: #{attention_gate.1} parent=5 // pred_check
      %p247 = pneg %p246
    $region34: #{attention_gate.1} parent=5 // pred_check_branch
      %249 = sbr.rel (%p247) target = $region36
    $region35: #{attention_gate.1} parent=5 // pred_region
      // Predicated region
      $region37: #{attention_gate.1} parent=35 // pred_check
        %p250 = pneg %p49
      $region38: #{attention_gate.1} parent=35 // pred_check_branch
        %252 = sbr.rel (%p250) target = $region40
      $region39: #{attention_gate.1} parent=35 // pred_region
        %s253 = smul.u32 2, %s23
        %p254 = scmp.lt.s32.totalorder %s22, 1
        %s255 = scalar_select %p254, %s22, 1
        %p256 = scmp.lt.s32.totalorder %s253, 1
        %s257 = scalar_select %p256, %s253, 1
        %s258 = smul.addr %s255, 2
        %s259 = sadd.s32 %s257, %s258
        %s260 = smul.addr %s259, 4
        %s261 = scalar_lea.vmem %s0, %s260
        %s262 = smul.u32 2, %s23
      $region40: #{attention_gate.1} parent=35 // pred_fallthru
        _
      // Predicated region
      $region41: #{attention_gate.1} parent=35 // pred_check
        %p263 = pneg %p77
      $region42: #{attention_gate.1} parent=35 // pred_check_branch
        %265 = sbr.rel (%p263) target = $region44
      $region43: #{attention_gate.1} parent=35 // pred_region
        %s266 = smul.u32 2, %s23
        %p267 = scmp.lt.s32.totalorder %s22, 1
        %s268 = scalar_select %p267, %s22, 1
        %p269 = scmp.lt.s32.totalorder %s266, 1
        %s270 = scalar_select %p269, %s266, 1
        %s271 = smul.addr %s268, 2
        %s272 = sadd.s32 %s270, %s271
        %s273 = smul.addr %s272, 4
        %s274 = scalar_lea.vmem %s1, %s273
        %s275 = smul.u32 2, %s23
      $region44: #{attention_gate.1} parent=35 // pred_fallthru
        _
    $region36: #{attention_gate.1} parent=5 // pred_fallthru
      _
    %p276 = scmp.le.s32.totalorder 1, %s15
    %p277 = scmp.lt.s32.totalorder %s15, 3
    %p278 = pnand %p276, %p277
    %p279 = pneg %p278
    // Predicated region
    $region45: #{attention_gate.1} parent=5 // pred_check
      _
    $region46: #{attention_gate.1} parent=5 // pred_check_branch
      %281 = sbr.rel (%p278) target = $region48
    $region47: #{attention_gate.1} parent=5 // pred_region
      %s282 = ssub.s32 %s15, 1
      %s283 = smul.u32 2, %s25
      %p284 = scmp.lt.s32.totalorder %s24, 1
      %s285 = scalar_select %p284, %s24, 1
      %p286 = scmp.lt.s32.totalorder %s283, 1
      %s287 = scalar_select %p286, %s283, 1
      %s288 = smul.addr %s285, 2
      %s289 = sadd.s32 %s287, %s288
      %s290 = smul.addr %s289, 4
      %s291 = scalar_lea.vmem %s0, %s290
      %p292 = pneg %p55
      %p293 = pneg %p52
      %s294 = smul.u32 2, %s25
      %p295 = scmp.lt.s32.totalorder %s24, 1
      %s296 = scalar_select %p295, %s24, 1
      %p297 = scmp.lt.s32.totalorder %s294, 1
      %s298 = scalar_select %p297, %s294, 1
      %s299 = smul.addr %s296, 2
      %s300 = sadd.s32 %s298, %s299
      %s301 = smul.addr %s300, 4
      %s302 = scalar_lea.vmem %s1, %s301
      %p303 = pneg %p83
      %p304 = pneg %p80
      %p305 = pneg %p104
      %p306 = pneg %p101
      %p307 = pneg %p125
      %p308 = pneg %p122
      %p309 = pneg %p146
      %p310 = pneg %p143
      %p311 = pneg %p167
      %p312 = pneg %p164
      %p313 = pneg %p188
      %p314 = pneg %p185
      %p315 = pneg %p216
      %p316 = pneg %p213
      %s317 = smul.u32 2, %s25
      %p318 = scmp.lt.s32.totalorder %s24, 1
      %s319 = scalar_select %p318, %s24, 1
      %p320 = scmp.lt.s32.totalorder %s317, 1
      %s321 = scalar_select %p320, %s317, 1
      %s322 = smul.addr %s319, 2
      %s323 = sadd.s32 %s321, %s322
      %s324 = smul.addr %s323, 4
      %s325 = scalar_lea.vmem %s7, %s324
      %s326 = smul.u32 2, %s25
      %p327 = scmp.lt.s32.totalorder %s24, 1
      %s328 = scalar_select %p327, %s24, 1
      %p329 = scmp.lt.s32.totalorder %s326, 1
      %s330 = scalar_select %p329, %s326, 1
      %s331 = smul.addr %s328, 2
      %s332 = sadd.s32 %s330, %s331
      %s333 = smul.addr %s332, 4
      %s334 = scalar_lea.vmem %s0, %s333
      %s335 = smul.u32 2, %s25
      %s336 = smul.u32 2, %s25
      %p337 = scmp.lt.s32.totalorder %s24, 1
      %s338 = scalar_select %p337, %s24, 1
      %p339 = scmp.lt.s32.totalorder %s336, 1
      %s340 = scalar_select %p339, %s336, 1
      %s341 = smul.addr %s338, 2
      %s342 = sadd.s32 %s340, %s341
      %s343 = smul.addr %s342, 4
      %s344 = scalar_lea.vmem %s1, %s343
      %s345 = smul.u32 2, %s25
      %s346 = smul.u32 2, %s25
      %p347 = scmp.lt.s32.totalorder %s24, 1
      %s348 = scalar_select %p347, %s24, 1
      %p349 = scmp.lt.s32.totalorder %s346, 1
      %s350 = scalar_select %p349, %s346, 1
      %s351 = smul.addr %s348, 2
      %s352 = sadd.s32 %s350, %s351
      %s353 = smul.addr %s352, 4
      %s354 = scalar_lea.vmem %s7, %s353
      %s355 = smul.u32 2, %s25
      %v356 = vld [vmem:[%s344] sm:$0xff]
      %v357 = vld [vmem:[%s334] sm:$0xff]
      %v358 = vld [vmem:[%s2] sm:$0xff]
      %v359 = vld [vmem:[%s3] sm:$0xff]
      %361 = vset.pattern.permute.xlu0 0
      %362 = vperm.xlu0 %361, %v358
      %v363 = vpop.permute.xlu0 %362
      %v366 = vlaneseq
      %v367 = vshrl.u32 %v366, 7
      %v368 = vsub.s32 0, %v367
      %v369 = vrot.slane %v357, %v368
      %v370 = vlaneseq
      %v371 = vshrl.u32 %v370, 7
      %v372 = vsub.s32 4, %v371
      %v373 = vrot.slane %v357, %v372
      %v376 = vlaneseq
      %v377 = vshrl.u32 %v376, 7
      %v378 = vsub.s32 0, %v377
      %v379 = vrot.slane %v369, %v378
      %v380 = vlaneseq
      %v381 = vshrl.u32 %v380, 7
      %v382 = vsub.s32 0, %v381
      %v383 = vrot.slane %v373, %v382
      %v384 = vmul.f32 %v363, %v379
      %v385 = vmul.f32 %v363, %v383
      %v386 = vadd.f32 %v384, 0.0
      %v387 = vadd.f32 %v385, 0.0
      %388 = vset.pattern.permute.xlu0 1
      %389 = vperm.xlu0 %388, %v358
      %v390 = vpop.permute.xlu0 %389
      %v392 = vlaneseq
      %v393 = vshrl.u32 %v392, 7
      %v394 = vsub.s32 1, %v393
      %v395 = vrot.slane %v357, %v394
      %v396 = vlaneseq
      %v397 = vshrl.u32 %v396, 7
      %v398 = vsub.s32 5, %v397
      %v399 = vrot.slane %v357, %v398
      %v402 = vlaneseq
      %v403 = vshrl.u32 %v402, 7
      %v404 = vsub.s32 1, %v403
      %v405 = vrot.slane %v395, %v404
      %v406 = vlaneseq
      %v407 = vshrl.u32 %v406, 7
      %v408 = vsub.s32 1, %v407
      %v409 = vrot.slane %v399, %v408
      %v410 = vmul.f32 %v390, %v405
      %v411 = vmul.f32 %v390, %v409
      %v412 = vadd.f32 %v386, %v410
      %v413 = vadd.f32 %v387, %v411
      %414 = vset.pattern.permute.xlu0 2
      %415 = vperm.xlu0 %414, %v358
      %v416 = vpop.permute.xlu0 %415
      %v418 = vlaneseq
      %v419 = vshrl.u32 %v418, 7
      %v420 = vsub.s32 2, %v419
      %v421 = vrot.slane %v357, %v420
      %v422 = vlaneseq
      %v423 = vshrl.u32 %v422, 7
      %v424 = vsub.s32 6, %v423
      %v425 = vrot.slane %v357, %v424
      %v428 = vlaneseq
      %v429 = vshrl.u32 %v428, 7
      %v430 = vsub.s32 2, %v429
      %v431 = vrot.slane %v421, %v430
      %v432 = vlaneseq
      %v433 = vshrl.u32 %v432, 7
      %v434 = vsub.s32 2, %v433
      %v435 = vrot.slane %v425, %v434
      %v436 = vmul.f32 %v416, %v431
      %v437 = vmul.f32 %v416, %v435
      %v438 = vadd.f32 %v412, %v436
      %v439 = vadd.f32 %v413, %v437
      %440 = vset.pattern.permute.xlu0 3
      %441 = vperm.xlu0 %440, %v358
      %v442 = vpop.permute.xlu0 %441
      %v444 = vlaneseq
      %v445 = vshrl.u32 %v444, 7
      %v446 = vsub.s32 3, %v445
      %v447 = vrot.slane %v357, %v446
      %v448 = vlaneseq
      %v449 = vshrl.u32 %v448, 7
      %v450 = vsub.s32 7, %v449
      %v451 = vrot.slane %v357, %v450
      %v454 = vlaneseq
      %v455 = vshrl.u32 %v454, 7
      %v456 = vsub.s32 3, %v455
      %v457 = vrot.slane %v447, %v456
      %v458 = vlaneseq
      %v459 = vshrl.u32 %v458, 7
      %v460 = vsub.s32 3, %v459
      %v461 = vrot.slane %v451, %v460
      %v462 = vmul.f32 %v442, %v457
      %v463 = vmul.f32 %v442, %v461
      %v464 = vadd.f32 %v438, %v462
      %v465 = vadd.f32 %v439, %v463
      %467 = vset.pattern.permute.xlu0 0
      %468 = vperm.xlu0 %467, %v359
      %v469 = vpop.permute.xlu0 %468
      %v472 = vlaneseq
      %v473 = vshrl.u32 %v472, 7
      %v474 = vsub.s32 0, %v473
      %v475 = vrot.slane %v356, %v474
      %v476 = vlaneseq
      %v477 = vshrl.u32 %v476, 7
      %v478 = vsub.s32 4, %v477
      %v479 = vrot.slane %v356, %v478
      %v482 = vlaneseq
      %v483 = vshrl.u32 %v482, 7
      %v484 = vsub.s32 0, %v483
      %v485 = vrot.slane %v475, %v484
      %v486 = vlaneseq
      %v487 = vshrl.u32 %v486, 7
      %v488 = vsub.s32 0, %v487
      %v489 = vrot.slane %v479, %v488
      %v490 = vmul.f32 %v469, %v485
      %v491 = vmul.f32 %v469, %v489
      %v492 = vadd.f32 %v464, %v490
      %v493 = vadd.f32 %v465, %v491
      %494 = vset.pattern.permute.xlu0 1
      %495 = vperm.xlu0 %494, %v359
      %v496 = vpop.permute.xlu0 %495
      %v498 = vlaneseq
      %v499 = vshrl.u32 %v498, 7
      %v500 = vsub.s32 1, %v499
      %v501 = vrot.slane %v356, %v500
      %v502 = vlaneseq
      %v503 = vshrl.u32 %v502, 7
      %v504 = vsub.s32 5, %v503
      %v505 = vrot.slane %v356, %v504
      %v508 = vlaneseq
      %v509 = vshrl.u32 %v508, 7
      %v510 = vsub.s32 1, %v509
      %v511 = vrot.slane %v501, %v510
      %v512 = vlaneseq
      %v513 = vshrl.u32 %v512, 7
      %v514 = vsub.s32 1, %v513
      %v515 = vrot.slane %v505, %v514
      %v516 = vmul.f32 %v496, %v511
      %v517 = vmul.f32 %v496, %v515
      %v518 = vadd.f32 %v492, %v516
      %v519 = vadd.f32 %v493, %v517
      %520 = vset.pattern.permute.xlu0 2
      %521 = vperm.xlu0 %520, %v359
      %v522 = vpop.permute.xlu0 %521
      %v524 = vlaneseq
      %v525 = vshrl.u32 %v524, 7
      %v526 = vsub.s32 2, %v525
      %v527 = vrot.slane %v356, %v526
      %v528 = vlaneseq
      %v529 = vshrl.u32 %v528, 7
      %v530 = vsub.s32 6, %v529
      %v531 = vrot.slane %v356, %v530
      %v534 = vlaneseq
      %v535 = vshrl.u32 %v534, 7
      %v536 = vsub.s32 2, %v535
      %v537 = vrot.slane %v527, %v536
      %v538 = vlaneseq
      %v539 = vshrl.u32 %v538, 7
      %v540 = vsub.s32 2, %v539
      %v541 = vrot.slane %v531, %v540
      %v542 = vmul.f32 %v522, %v537
      %v543 = vmul.f32 %v522, %v541
      %v544 = vadd.f32 %v518, %v542
      %v545 = vadd.f32 %v519, %v543
      %546 = vset.pattern.permute.xlu0 3
      %547 = vperm.xlu0 %546, %v359
      %v548 = vpop.permute.xlu0 %547
      %v550 = vlaneseq
      %v551 = vshrl.u32 %v550, 7
      %v552 = vsub.s32 3, %v551
      %v553 = vrot.slane %v356, %v552
      %v554 = vlaneseq
      %v555 = vshrl.u32 %v554, 7
      %v556 = vsub.s32 7, %v555
      %v557 = vrot.slane %v356, %v556
      %v560 = vlaneseq
      %v561 = vshrl.u32 %v560, 7
      %v562 = vsub.s32 3, %v561
      %v563 = vrot.slane %v553, %v562
      %v564 = vlaneseq
      %v565 = vshrl.u32 %v564, 7
      %v566 = vsub.s32 3, %v565
      %v567 = vrot.slane %v557, %v566
      %v568 = vmul.f32 %v548, %v563
      %v569 = vmul.f32 %v548, %v567
      %v570 = vadd.f32 %v544, %v568
      %v571 = vadd.f32 %v545, %v569
      %v572 = vld [vmem:[%s4] sm:$0xff]
      %574 = vset.pattern.permute.xlu0 0
      %575 = vperm.xlu0 %574, %v572
      %v576 = vpop.permute.xlu0 %575
      %v578 = vadd.f32 %v570, %v576
      %v579 = vadd.f32 %v571, %v576
      %v580 = vmax.f32 %v578, 0.0
      %v581 = vmax.f32 %v579, 0.0
      %v582 = vld [vmem:[%s5] sm:$0xff]
      %584 = vset.pattern.permute.xlu0 0
      %585 = vperm.xlu0 %584, %v582
      %v586 = vpop.permute.xlu0 %585
      %v588 = vmul.f32 %v580, %v586
      %v589 = vmul.f32 %v581, %v586
      %v590 = vrot.slane %v588, 4
      %v591 = vadd.f32 %v588, %v590
      %v592 = vrot.slane %v591, 2
      %v593 = vadd.f32 %v591, %v592
      %v594 = vrot.slane %v593, 1
      %v595 = vadd.f32 %v593, %v594
      %v596 = vrot.slane %v589, 4
      %v597 = vadd.f32 %v589, %v596
      %v598 = vrot.slane %v597, 2
      %v599 = vadd.f32 %v597, %v598
      %v600 = vrot.slane %v599, 1
      %v601 = vadd.f32 %v599, %v600
      %v602 = vld [vmem:[#allocation2] sm:$0x1]
      %604 = vset.pattern.permute.xlu0 0
      %605 = vperm.xlu0 %604, %v602
      %v606 = vpop.permute.xlu0 %605
      %v608 = vlaneseq
      %v609 = vshrl.u32 %v608, 7
      %v610 = vsub.s32 0, %v609
      %v611 = vrot.slane %v606, %v610
      %v612 = vadd.f32 %v595, %v611
      %v613 = vadd.f32 %v601, %v611
      %v614 = vxor.u32 %v612, 2147483648
      %v615 = vxor.u32 %v613, 2147483648
      %v616 = vmul.f32 %v614, 1.442695
      %v617 = vpow.pop %v616
      %v618 = vmul.f32 %v615, 1.442695
      %v619 = vpow.pop %v618
      %v620 = vadd.f32 %v617, 1.0
      %v621 = vadd.f32 %v619, 1.0
      %v622 = vrcp.pop %v620
      %v623 = vmul.f32 1.0, %v622
      %v624 = vrcp.pop %v621
      %v625 = vmul.f32 1.0, %v624
      %v628 = vcombine.low %v623, %v625
      %v630 = vmul.f32 %v356, %v628
      %631 = vst [vmem:[%s354] sm:$0xff] %v630
      %s632 = smul.u32 2, %s25
      %p633 = scmp.lt.s32.totalorder %s24, 1
      %s634 = scalar_select %p633, %s24, 1
      %p635 = scmp.lt.s32.totalorder %s632, 1
      %s636 = scalar_select %p635, %s632, 1
      %s637 = smul.addr %s634, 2
      %s638 = sadd.s32 %s636, %s637
      %s639 = smul.addr %s638, 4
      %s640 = scalar_lea.vmem %s7, %s639
      // Predicated region
      $region49: #{attention_gate.1} parent=47 // pred_check
        %p641 = pneg %p213
      $region50: #{attention_gate.1} parent=47 // pred_check_branch
        %643 = sbr.rel (%p641) target = $region52
      $region51: #{attention_gate.1} parent=47 // pred_region
        %s644 = smul.u32 2, %s25
      $region52: #{attention_gate.1} parent=47 // pred_fallthru
        _
    $region48: #{attention_gate.1} parent=5 // pred_fallthru
      _
    %p645 = scmp.le.s32.totalorder 2, %s15
    // Predicated region
    $region53: #{attention_gate.1} parent=5 // pred_check
      %p646 = pneg %p645
    $region54: #{attention_gate.1} parent=5 // pred_check_branch
      %648 = sbr.rel (%p646) target = $region56
    $region55: #{attention_gate.1} parent=5 // pred_region
      %s649 = ssub.s32 %s15, 2
      // Predicated region
      $region57: #{attention_gate.1} parent=55 // pred_check
        %p650 = pneg %p219
      $region58: #{attention_gate.1} parent=55 // pred_check_branch
        %652 = sbr.rel (%p650) target = $region60
      $region59: #{attention_gate.1} parent=55 // pred_region
        %s653 = smul.u32 2, %s27
        %p654 = scmp.lt.s32.totalorder %s26, 1
        %s655 = scalar_select %p654, %s26, 1
        %p656 = scmp.lt.s32.totalorder %s653, 1
        %s657 = scalar_select %p656, %s653, 1
        %s658 = smul.addr %s655, 2
        %s659 = sadd.s32 %s657, %s658
        %s660 = smul.addr %s659, 4
        %s661 = scalar_lea.vmem %s7, %s660
      $region60: #{attention_gate.1} parent=55 // pred_fallthru
        _
    $region56: #{attention_gate.1} parent=5 // pred_fallthru
      _
  $region6: #{attention_gate.1} parent=0 // loop_footer
    %s19 = sadd.s32 1, %s15
  $region7: #{attention_gate.1} parent=0 // loop_footer_branch
    %14 = sbr.rel target = $region3
  $region8: #{attention_gate.1} parent=0 // loop_exit
    _

</llo_original>
